<compile_context>
chip_gen: v7x
topology: tpu7x:2x2x1
jax: 0.10.0
libtpu: 0.0.40
codegen_flags: <defaults>
</compile_context>

<pallas_src>
import functools

import jax
import jax.numpy as jnp
from jax.experimental import pallas as pl
from jax.experimental.pallas import tpu as pltpu


def _sdpa_kernel(q_ref, k_ref, v_ref, mask_ref, out_ref, *attn_refs, scale):
    # Blocks: q (TB, Tq, Dk), k (TB, Sk, Dk), v (TB, Sk, Dv),
    #         mask (TB or 1, Tq, Sk) int8, out (TB, Tq, Dv), [attn (TB, Tq, Sk)].
    q = q_ref[...] * scale            # fold 1/sqrt(d_k) into Q (Tq*Dk muls, not Tq*Sk)
    k = k_ref[...]
    v = v_ref[...]

    # Batched QK^T: contract on the last dims -- no explicit transpose of K materialized.
    scores = jnp.einsum("bqd,bkd->bqk", q, k, preferred_element_type=jnp.float32)

    # masked_fill_(attn_mask, -1e9); a (1, Tq, Sk) shared mask broadcasts over TB heads.
    scores = jnp.where(mask_ref[...] != 0, jnp.float32(-1e9), scores)

    # Numerically-stable softmax over the key axis (full Sk resident in this tile).
    m = jnp.max(scores, axis=-1, keepdims=True)
    e = jnp.exp(scores - m)
    denom = jnp.sum(e, axis=-1, keepdims=True)
    weights = e / denom               # exact divide: weights are a user-visible output

    # weights @ v
    out = jnp.einsum("bqk,bkd->bqd", weights.astype(v.dtype), v,
                     preferred_element_type=jnp.float32)

    out_ref[...] = out.astype(out_ref.dtype)
    if attn_refs:
        attn_refs[0][...] = weights.astype(attn_refs[0].dtype)


def _vmem_capacity_bytes():
    """VMEM per core; fall back to the smallest (v7x, 64 MiB) if the query fails."""
    try:
        info = pltpu.get_tpu_info()
        cap = getattr(info, "vmem_capacity_bytes", None)
        if cap:
            return int(cap)
    except Exception:
        pass
    return 64 * 1024 * 1024


def _choose_tiles(BH, Sq, Sk, Dk, Dv, io_bytes, mask_shared, emit_attn, budget_bytes):
    """Pick (TB, Tq) so per-step VMEM (double-buffered I/O + f32 intermediates) fits."""
    # Keep the MXU M dimension fed: full Sq for short sequences, otherwise >=128.
    # Shrink TB (heads per step) before ever shrinking Tq.
    tq_candidates = [Sq] if Sq <= 256 else [256, 128]

    def step_bytes(tb, tq):
        # DMA'd blocks (double-buffered by the pipeline): q, k, v, out, mask, attn.
        dma = (tq * Dk + Sk * Dk + Sk * Dv + tq * Dv) * io_bytes
        dma += 0 if mask_shared else tq * Sk                 # per-(b,h) int8 mask
        dma += tq * Sk * io_bytes if emit_attn else 0        # attention-weights output
        dma *= tb
        dma += tq * Sk if mask_shared else 0                 # one shared int8 mask copy
        # f32 intermediates (scores, exp, weights) live simultaneously inside the step.
        live = 3 * tb * tq * Sk * 4
        return 2 * dma + live

    tq = tq_candidates[-1]
    for cand in tq_candidates:
        if step_bytes(1, cand) <= budget_bytes:
            tq = cand
            break

    n_q = pl.cdiv(Sq, tq)
    divisors = [d for d in range(BH, 0, -1) if BH % d == 0]
    fitting = [d for d in divisors if step_bytes(d, tq) <= budget_bytes] or [1]
    # Prefer BH//TB >= 2 so dual-TensorCore parts shard the head axis: each core then
    # streams distinct K/V and keeps the K/V-resident benefit of the inner q axis.
    pref = [d for d in fitting if BH // d >= 2]
    if not pref:
        pref = [d for d in fitting if (BH // d) * n_q >= 2] or fitting
    return pref[0], tq


def scaled_dot_product_attention(q, k, v, attn_mask, *, return_attn_weights=True):
    """q,k: [B,H,Sq,Dk]; v: [B,H,Sk,Dv]; attn_mask bool, True => masked out.

    attn_mask may be the full [B,H,Sq,Sk] mask or a shared [Sq,Sk] / [1,1,Sq,Sk] mask.
    """
    B, H, Sq, Dk = q.shape
    Sk = k.shape[2]
    Dv = v.shape[3]
    BH = B * H

    qf = q.reshape(BH, Sq, Dk)
    kf = k.reshape(BH, Sk, Dk)
    vf = v.reshape(BH, Sk, Dv)

    # Shared masks stay a single HBM copy (index_map ignores the head axis).
    if attn_mask.ndim == 2:
        mask_shared = True
        maskf = attn_mask.reshape(1, Sq, Sk).astype(jnp.int8)
    elif attn_mask.ndim == 4 and attn_mask.shape[0] == 1 and attn_mask.shape[1] == 1:
        mask_shared = True
        maskf = attn_mask.reshape(1, Sq, Sk).astype(jnp.int8)
    else:
        mask_shared = False
        maskf = jnp.broadcast_to(attn_mask, (B, H, Sq, Sk)).reshape(BH, Sq, Sk)
        maskf = maskf.astype(jnp.int8)

    io_bytes = jnp.dtype(q.dtype).itemsize

    # Per-generation VMEM budgets: v5e/v6e have 128 MiB per core, v7x only 64 MiB.
    vmem_cap = _vmem_capacity_bytes()
    if vmem_cap >= 100 * 1024 * 1024:
        budget = 56 * 1024 * 1024
        vmem_limit = 100 * 1024 * 1024
    else:
        budget = 24 * 1024 * 1024
        vmem_limit = 48 * 1024 * 1024

    TB, Tq = _choose_tiles(BH, Sq, Sk, Dk, Dv, io_bytes, mask_shared,
                           return_attn_weights, budget)
    n_bh = BH // TB
    n_q = pl.cdiv(Sq, Tq)

    scale = 1.0 / float(Dk) ** 0.5
    kernel = functools.partial(_sdpa_kernel, scale=scale)

    mask_index_map = (lambda b, i: (0, i, 0)) if mask_shared else (lambda b, i: (b, i, 0))
    mask_tb = 1 if mask_shared else TB

    out_shapes = [jax.ShapeDtypeStruct((BH, Sq, Dv), q.dtype)]
    out_specs = [pl.BlockSpec((TB, Tq, Dv), lambda b, i: (b, i, 0))]
    if return_attn_weights:
        out_shapes.append(jax.ShapeDtypeStruct((BH, Sq, Sk), q.dtype))
        out_specs.append(pl.BlockSpec((TB, Tq, Sk), lambda b, i: (b, i, 0)))

    # Advisory cost estimate so XLA can schedule the surrounding graph sensibly.
    flops = 2 * BH * Sq * Sk * (Dk + Dv)
    bytes_accessed = (qf.size + kf.size + vf.size + BH * Sq * Dv) * io_bytes + maskf.size
    if return_attn_weights:
        bytes_accessed += BH * Sq * Sk * io_bytes
    cost = pl.CostEstimate(flops=flops, transcendentals=BH * Sq * Sk,
                           bytes_accessed=bytes_accessed)

    results = pl.pallas_call(
        kernel,
        out_shape=tuple(out_shapes),
        grid_spec=pltpu.PrefetchScalarGridSpec(
            num_scalar_prefetch=0,
            # q-tile axis innermost: K/V block indices are constant across it, so the
            # pipeline keeps K/V resident instead of re-DMAing them per q-tile.
            grid=(n_bh, n_q),
            in_specs=[
                pl.BlockSpec((TB, Tq, Dk), lambda b, i: (b, i, 0)),
                pl.BlockSpec((TB, Sk, Dk), lambda b, i: (b, 0, 0)),
                pl.BlockSpec((TB, Sk, Dv), lambda b, i: (b, 0, 0)),
                pl.BlockSpec((mask_tb, Tq, Sk), mask_index_map),
            ],
            out_specs=out_specs,
        ),
        compiler_params=pltpu.CompilerParams(
            dimension_semantics=("parallel", "parallel"),
            vmem_limit_bytes=vmem_limit,
        ),
        cost_estimate=cost,
    )(qf, kf, vf, maskf)

    out = results[0].reshape(B, H, Sq, Dv)
    if return_attn_weights:
        return out, results[1].reshape(B, H, Sq, Sk)
    return out


def _reference(q, k, v, attn_mask):
    d_k = q.shape[-1]
    scores = jnp.einsum("bhqd,bhkd->bhqk", q, k) / jnp.sqrt(jnp.float32(d_k))
    scores = jnp.where(attn_mask, -1e9, scores)
    weights = jax.nn.softmax(scores, axis=-1)
    out = jnp.einsum("bhqk,bhkd->bhqd", weights, v)
    return out, weights


if __name__ == "__main__":
    key = jax.random.PRNGKey(0)
    B, H, S, Dk = 2, 2, 8, 32
    kq, kk, kv = jax.random.split(key, 3)

    q = jax.random.normal(kq, (B, H, S, Dk), dtype=jnp.float32)
    k = jax.random.normal(kk, (B, H, S, Dk), dtype=jnp.float32)
    v = jax.random.normal(kv, (B, H, S, Dk), dtype=jnp.float32)
    # deterministic causal mask (True => masked out)
    causal = jnp.triu(jnp.ones((S, S), dtype=bool), k=1)
    attn_mask = jnp.broadcast_to(causal, (B, H, S, S))

    out_ref, attn_ref = _reference(q, k, v, attn_mask)

    # Full per-(b,h) mask path (exact torch signature).
    out, attn = scaled_dot_product_attention(q, k, v, attn_mask)
    jax.block_until_ready((out, attn))
    assert jnp.allclose(out, out_ref, atol=1e-4, rtol=1e-4), "output mismatch"
    assert jnp.allclose(attn, attn_ref, atol=1e-4, rtol=1e-4), "weights mismatch"

    # Shared-mask fast path ([Sq, Sk] mask kept as one HBM copy) must match too.
    out2, attn2 = scaled_dot_product_attention(q, k, v, causal)
    jax.block_until_ready((out2, attn2))
    assert jnp.allclose(out2, out_ref, atol=1e-4, rtol=1e-4), "shared-mask output mismatch"
    assert jnp.allclose(attn2, attn_ref, atol=1e-4, rtol=1e-4), "shared-mask weights mismatch"

    print("KERNEL_OK")
</pallas_src>

<mosaic_0001>
module attributes {stable_mosaic.version = 11 : i64} {
  func.func @_sdpa_kernel(%arg0: i32, %arg1: i32, %arg2: memref<2x8x32xf32, #tpu.memory_space<vmem>>, %arg3: memref<2x8x32xf32, #tpu.memory_space<vmem>>, %arg4: memref<2x8x32xf32, #tpu.memory_space<vmem>>, %arg5: memref<2x8x8xi8, #tpu.memory_space<vmem>>, %arg6: memref<2x8x32xf32, #tpu.memory_space<vmem>>, %arg7: memref<2x8x8xf32, #tpu.memory_space<vmem>>) attributes {dimension_semantics = [#tpu.dimension_semantics<parallel>, #tpu.dimension_semantics<parallel>], iteration_bounds = array<i64: 2, 1>, scalar_prefetch = 0 : i64, scratch_operands = 0 : i64, tpu.core_type = #tpu.core_type<tc>, window_params = [{transform_indices = @transform_0, window_bounds = array<i64: 2, 8, 32>}, {transform_indices = @transform_1, window_bounds = array<i64: 2, 8, 32>}, {transform_indices = @transform_2, window_bounds = array<i64: 2, 8, 32>}, {transform_indices = @transform_3, window_bounds = array<i64: 2, 8, 8>}, {transform_indices = @transform_4, window_bounds = array<i64: 2, 8, 32>}, {transform_indices = @transform_5, window_bounds = array<i64: 2, 8, 8>}]} {
    %c0 = arith.constant 0 : index
    %c0_0 = arith.constant 0 : index
    %c0_1 = arith.constant 0 : index
    %0 = vector.load %arg2[%c0, %c0_0, %c0_1] : memref<2x8x32xf32, #tpu.memory_space<vmem>>, vector<2x8x32xf32>
    %cst = arith.constant 0.176776692 : f32
    %1 = vector.broadcast %cst : f32 to vector<2x8x32xf32>
    %2 = arith.mulf %0, %1 : vector<2x8x32xf32>
    %c0_2 = arith.constant 0 : index
    %c0_3 = arith.constant 0 : index
    %c0_4 = arith.constant 0 : index
    %3 = vector.load %arg3[%c0_2, %c0_3, %c0_4] : memref<2x8x32xf32, #tpu.memory_space<vmem>>, vector<2x8x32xf32>
    %c0_5 = arith.constant 0 : index
    %c0_6 = arith.constant 0 : index
    %c0_7 = arith.constant 0 : index
    %4 = vector.load %arg4[%c0_5, %c0_6, %c0_7] : memref<2x8x32xf32, #tpu.memory_space<vmem>>, vector<2x8x32xf32>
    "tpu.trace_start"() <{level = 10 : i32, message = "bqd,bkd->bqk"}> : () -> ()
    %cst_8 = arith.constant dense<0.000000e+00> : vector<2x8x8xf32>
    %5 = tpu.matmul %2, %3, %cst_8 {dimension_numbers = #tpu.dot_dimension_numbers<[2], [2], [1], [1], [0, 0, 0, 1, 1, 1], [0], [0]>} : vector<2x8x32xf32>, vector<2x8x32xf32>, vector<2x8x8xf32> -> vector<2x8x8xf32>
    "tpu.trace_stop"() : () -> ()
    %c0_9 = arith.constant 0 : index
    %c0_10 = arith.constant 0 : index
    %c0_11 = arith.constant 0 : index
    %6 = vector.load %arg5[%c0_9, %c0_10, %c0_11] : memref<2x8x8xi8, #tpu.memory_space<vmem>>, vector<2x8x8xi8>
    %c0_i8 = arith.constant 0 : i8
    %7 = vector.broadcast %c0_i8 : i8 to vector<2x8x8xi8>
    %8 = arith.cmpi ne, %6, %7 : vector<2x8x8xi8>
    %cst_12 = arith.constant -1.000000e+09 : f32
    %9 = vector.broadcast %cst_12 : f32 to vector<2x8x8xf32>
    %10 = arith.select %8, %9, %5 : vector<2x8x8xi1>, vector<2x8x8xf32>
    %cst_13 = arith.constant dense<0xFF800000> : vector<2x8xf32>
    %11 = vector.multi_reduction <maximumf>, %10, %cst_13 [2] : vector<2x8x8xf32> to vector<2x8xf32>
    %12 = vector.shape_cast %11 : vector<2x8xf32> to vector<2x8x1xf32>
    %13 = vector.broadcast %12 : vector<2x8x1xf32> to vector<2x8x8xf32>
    %14 = arith.subf %10, %13 : vector<2x8x8xf32>
    %15 = math.exp %14 : vector<2x8x8xf32>
    %cst_14 = arith.constant dense<0.000000e+00> : vector<2x8xf32>
    %16 = vector.multi_reduction <add>, %15, %cst_14 [2] : vector<2x8x8xf32> to vector<2x8xf32>
    %17 = vector.shape_cast %16 : vector<2x8xf32> to vector<2x8x1xf32>
    %18 = vector.broadcast %17 : vector<2x8x1xf32> to vector<2x8x8xf32>
    %19 = arith.divf %15, %18 : vector<2x8x8xf32>
    "tpu.trace_start"() <{level = 10 : i32, message = "bqk,bkd->bqd"}> : () -> ()
    %cst_15 = arith.constant dense<0.000000e+00> : vector<2x8x32xf32>
    %20 = tpu.matmul %19, %4, %cst_15 {dimension_numbers = #tpu.dot_dimension_numbers<[2], [1], [1], [2], [0, 0, 0, 1, 1, 2], [0], [0]>} : vector<2x8x8xf32>, vector<2x8x32xf32>, vector<2x8x32xf32> -> vector<2x8x32xf32>
    "tpu.trace_stop"() : () -> ()
    %c0_16 = arith.constant 0 : index
    %c0_17 = arith.constant 0 : index
    %c0_18 = arith.constant 0 : index
    %21 = vector.load %arg6[%c0_16, %c0_17, %c0_18] : memref<2x8x32xf32, #tpu.memory_space<vmem>>, vector<2x8x32xf32>
    tpu.vector_store %arg6[%c0_16, %c0_17, %c0_18], %20 {strides = array<i32>} : memref<2x8x32xf32, #tpu.memory_space<vmem>>, vector<2x8x32xf32>,
    %c0_19 = arith.constant 0 : index
    %c0_20 = arith.constant 0 : index
    %c0_21 = arith.constant 0 : index
    %22 = vector.load %arg7[%c0_19, %c0_20, %c0_21] : memref<2x8x8xf32, #tpu.memory_space<vmem>>, vector<2x8x8xf32>
    tpu.vector_store %arg7[%c0_19, %c0_20, %c0_21], %19 {strides = array<i32>} : memref<2x8x8xf32, #tpu.memory_space<vmem>>, vector<2x8x8xf32>,
    return
  }
  func.func @transform_0(%arg0: i32, %arg1: i32) -> (i32, i32, i32) {
    %c0_i32 = arith.constant 0 : i32
    %c0_i32_0 = arith.constant 0 : i32
    return %arg0, %arg1, %c0_i32 : i32, i32, i32
  }
  func.func @transform_1(%arg0: i32, %arg1: i32) -> (i32, i32, i32) {
    %c0_i32 = arith.constant 0 : i32
    %c0_i32_0 = arith.constant 0 : i32
    %c0_i32_1 = arith.constant 0 : i32
    return %arg0, %c0_i32, %c0_i32_0 : i32, i32, i32
  }
  func.func @transform_2(%arg0: i32, %arg1: i32) -> (i32, i32, i32) {
    %c0_i32 = arith.constant 0 : i32
    %c0_i32_0 = arith.constant 0 : i32
    %c0_i32_1 = arith.constant 0 : i32
    return %arg0, %c0_i32, %c0_i32_0 : i32, i32, i32
  }
  func.func @transform_3(%arg0: i32, %arg1: i32) -> (i32, i32, i32) {
    %c0_i32 = arith.constant 0 : i32
    %c0_i32_0 = arith.constant 0 : i32
    return %arg0, %arg1, %c0_i32 : i32, i32, i32
  }
  func.func @transform_4(%arg0: i32, %arg1: i32) -> (i32, i32, i32) {
    %c0_i32 = arith.constant 0 : i32
    %c0_i32_0 = arith.constant 0 : i32
    return %arg0, %arg1, %c0_i32 : i32, i32, i32
  }
  func.func @transform_5(%arg0: i32, %arg1: i32) -> (i32, i32, i32) {
    %c0_i32 = arith.constant 0 : i32
    %c0_i32_0 = arith.constant 0 : i32
    return %arg0, %arg1, %c0_i32 : i32, i32, i32
  }
}

</mosaic_0001>

<llo_original>
// kernel: tpu_custom_call.1
$region0: #{tpu_custom_call.1}
  #allocation0 [shape = 'u32[]', space=smem, size = 0x4, offset = 0x4, fixed_abs, tag = 'smem constant byte address 0x4 - core index']
  #allocation1 [shape = 'u32[144,128]{1,0:T(1,128)}', space=vmem, size = 0x12000, scoped, tag = 'internal scratch']
  %s0 = inlined_call_operand.hbm [shape: f32[4,8,32], index: 0, kind: input, shape index: {}]
  %s1 = inlined_call_operand.hbm [shape: f32[4,8,32], index: 1, kind: input, shape index: {}]
  %s2 = inlined_call_operand.hbm [shape: f32[4,8,32], index: 2, kind: input, shape index: {}]
  %s3 = inlined_call_operand.vmem [shape: s8[4,8,8], index: 3, kind: input, shape index: {}]
  %s4 = inlined_call_operand.hbm [shape: f32[4,8,32], index: 4, kind: output, shape index: {0}]
  %s5 = inlined_call_operand.hbm [shape: f32[4,8,8], index: 5, kind: output, shape index: {1}]
  %6 = xla_tuple %s4, %s5
  %s7 = sld [smem:[#allocation0]]
  $region69: #{tpu_custom_call.1} parent=0
    _
  %s9 = ssub.s32 1, %s7
  %s10 = scalar_select 0, %s9, %s7
  $region1: #{tpu_custom_call.1} parent=0
    #allocation2 [shape = 'u8[16384]{0}', space=vmem, size = 0x4000, scoped, tag = 'input window, operand 0']
    #allocation3 [shape = 's32[2]{0}', space=sflag, size = 0x8, scoped, tag = 'scoped memory for tpu_custom_call.1']
    #allocation4 [shape = 's32[2]{0}', space=sflag, size = 0x8, scoped, tag = 'scoped memory for tpu_custom_call.1']
    #allocation5 [shape = 'u8[16384]{0}', space=vmem, size = 0x4000, scoped, tag = 'input window, operand 1']
    #allocation6 [shape = 's32[2]{0}', space=sflag, size = 0x8, scoped, tag = 'scoped memory for tpu_custom_call.1']
    #allocation7 [shape = 'u8[16384]{0}', space=vmem, size = 0x4000, scoped, tag = 'input window, operand 2']
    #allocation8 [shape = 'u8[16384]{0}', space=vmem, size = 0x4000, scoped, tag = 'output window, operand 0']
    #allocation9 [shape = 'u8[16384]{0}', space=vmem, size = 0x4000, scoped, tag = 'output window, operand 1']
    #allocation10 [shape = 's32[2]{0}', space=sflag, size = 0x8, scoped, tag = 'scoped memory for tpu_custom_call.1']
    %11 = vsyncpa [#allocation3], 0
    %s12 = scalar_lea.sflag [#allocation3], 1
    %13 = vsyncpa %s12, 0
    %14 = vsyncpa [#allocation6], 0
    %s15 = scalar_lea.sflag [#allocation6], 1
    %16 = vsyncpa %s15, 0
    %17 = vsyncpa [#allocation4], 0
    %s18 = scalar_lea.sflag [#allocation4], 1
    %19 = vsyncpa %s18, 0
    %20 = vsyncpa [#allocation10], 0
    %s21 = scalar_lea.sflag [#allocation10], 1
    %22 = vsyncpa %s21, 0
    loop: start=0, step=1, limit=4
    $region2: #{tpu_custom_call.1} parent=1 // loop_pre_header
      _
    $region3: #{tpu_custom_call.1} parent=1 // loop_header
      %s24 = sphi 0, %s28
      %p25 = scmp.ge.s32.totalorder %s24, 4
      %s31 = sphi 0, %s43
      %s32 = sphi 0, %s39
      %s33 = sphi 0, %s31
      %s34 = sphi 0, %s32
      %s35 = sphi 0, %s33
      %s36 = sphi 0, %s34
      %s48 = sphi 0, %s50
      %s51 = sphi 0, %s48
      %s52 = sphi 0, %s51
      %s68 = sphi 0, %s52
      %s74 = sphi 0, %s76
      %s77 = sphi 0, %s74
      %s78 = sphi 0, %s77
      %s94 = sphi 0, %s78
      %s100 = sphi 0, %s102
      %s103 = sphi 0, %s100
      %s104 = sphi 0, %s103
      %s120 = sphi 0, %s104
      %s128 = sphi 0, %s130
      %s131 = sphi 0, %s128
      %s132 = sphi 0, %s131
      %s148 = sphi 0, %s132
      %s156 = sphi 0, %s158
      %s159 = sphi 0, %s156
      %s160 = sphi 0, %s159
      %s176 = sphi 0, %s160
      %s184 = sphi 0, %s186
      %s187 = sphi 0, %s184
      %s188 = sphi 0, %s187
      %s204 = sphi 0, %s188
    $region4: #{tpu_custom_call.1} parent=1 // loop_header_branch
      %27 = sbr.rel (%p25) target = $region8
    $region5: #{tpu_custom_call.1} parent=1 // loop_body
      %s29 = ssub.s32 %s24, 1
      %s30 = ssub.s32 %s24, 2
      %s37 = sadd.s32 1, %s32
      %p38 = scmp.ge.s32.totalorder %s37, 1
      %s39 = scalar_select %p38, 0, %s37
      %s40 = sadd.s32 1, %s31
      %s41 = scalar_select %p38, %s40, %s31
      %p42 = scmp.ge.s32.totalorder %s41, 2
      %s43 = scalar_select %p42, 0, %s41
      %s44 = ssub.s32 %s31, %s43
      %s45 = ssub.s32 %s32, %s39
      %s46 = sor.u32 %s44, %s45
      %p47 = scmp.eq.s32.totalorder %s46, 0
      %s49 = sadd.s32 %s48, 1
      %s50 = scalar_select %p47, %s48, %s49
      %p53 = pneg %p47
      %p54 = scmp.eq.s32.totalorder %s24, 1
      %p55 = por %p53, %p54
      %p56 = scmp.ne.s32.totalorder %s48, %s51
      %p57 = scmp.eq.s32.totalorder %s24, 0
      %p58 = por %p56, %p57
      %p59 = scmp.ne.s32.totalorder %s48, %s51
      %p60 = scmp.eq.s32.totalorder %s29, 1
      %p61 = por %p59, %p60
      %p62 = scmp.ne.s32.totalorder %s51, %s52
      %p63 = scmp.eq.s32.totalorder %s29, 0
      %p64 = por %p62, %p63
      %p65 = scmp.ne.s32.totalorder %s51, %s52
      %p66 = scmp.eq.s32.totalorder %s30, 1
      %p67 = por %p65, %p66
      %p69 = scmp.ne.s32.totalorder %s52, %s68
      %p70 = scmp.eq.s32.totalorder %s30, 0
      %p71 = por %p69, %p70
      %s72 = ssub.s32 %s31, %s43
      %p73 = scmp.eq.s32.totalorder %s72, 0
      %s75 = sadd.s32 %s74, 1
      %s76 = scalar_select %p73, %s74, %s75
      %p79 = pneg %p73
      %p80 = scmp.eq.s32.totalorder %s24, 1
      %p81 = por %p79, %p80
      %p82 = scmp.ne.s32.totalorder %s74, %s77
      %p83 = scmp.eq.s32.totalorder %s24, 0
      %p84 = por %p82, %p83
      %p85 = scmp.ne.s32.totalorder %s74, %s77
      %p86 = scmp.eq.s32.totalorder %s29, 1
      %p87 = por %p85, %p86
      %p88 = scmp.ne.s32.totalorder %s77, %s78
      %p89 = scmp.eq.s32.totalorder %s29, 0
      %p90 = por %p88, %p89
      %p91 = scmp.ne.s32.totalorder %s77, %s78
      %p92 = scmp.eq.s32.totalorder %s30, 1
      %p93 = por %p91, %p92
      %p95 = scmp.ne.s32.totalorder %s78, %s94
      %p96 = scmp.eq.s32.totalorder %s30, 0
      %p97 = por %p95, %p96
      %s98 = ssub.s32 %s31, %s43
      %p99 = scmp.eq.s32.totalorder %s98, 0
      %s101 = sadd.s32 %s100, 1
      %s102 = scalar_select %p99, %s100, %s101
      %p105 = pneg %p99
      %p106 = scmp.eq.s32.totalorder %s24, 1
      %p107 = por %p105, %p106
      %p108 = scmp.ne.s32.totalorder %s100, %s103
      %p109 = scmp.eq.s32.totalorder %s24, 0
      %p110 = por %p108, %p109
      %p111 = scmp.ne.s32.totalorder %s100, %s103
      %p112 = scmp.eq.s32.totalorder %s29, 1
      %p113 = por %p111, %p112
      %p114 = scmp.ne.s32.totalorder %s103, %s104
      %p115 = scmp.eq.s32.totalorder %s29, 0
      %p116 = por %p114, %p115
      %p117 = scmp.ne.s32.totalorder %s103, %s104
      %p118 = scmp.eq.s32.totalorder %s30, 1
      %p119 = por %p117, %p118
      %p121 = scmp.ne.s32.totalorder %s104, %s120
      %p122 = scmp.eq.s32.totalorder %s30, 0
      %p123 = por %p121, %p122
      %s124 = ssub.s32 %s31, %s43
      %s125 = ssub.s32 %s32, %s39
      %s126 = sor.u32 %s124, %s125
      %p127 = scmp.eq.s32.totalorder %s126, 0
      %s129 = sadd.s32 %s128, 1
      %s130 = scalar_select %p127, %s128, %s129
      %p133 = pneg %p127
      %p134 = scmp.eq.s32.totalorder %s24, 1
      %p135 = por %p133, %p134
      %p136 = scmp.ne.s32.totalorder %s128, %s131
      %p137 = scmp.eq.s32.totalorder %s24, 0
      %p138 = por %p136, %p137
      %p139 = scmp.ne.s32.totalorder %s128, %s131
      %p140 = scmp.eq.s32.totalorder %s29, 1
      %p141 = por %p139, %p140
      %p142 = scmp.ne.s32.totalorder %s131, %s132
      %p143 = scmp.eq.s32.totalorder %s29, 0
      %p144 = por %p142, %p143
      %p145 = scmp.ne.s32.totalorder %s131, %s132
      %p146 = scmp.eq.s32.totalorder %s30, 1
      %p147 = por %p145, %p146
      %p149 = scmp.ne.s32.totalorder %s132, %s148
      %p150 = scmp.eq.s32.totalorder %s30, 0
      %p151 = por %p149, %p150
      %s152 = ssub.s32 %s31, %s43
      %s153 = ssub.s32 %s32, %s39
      %s154 = sor.u32 %s152, %s153
      %p155 = scmp.eq.s32.totalorder %s154, 0
      %s157 = sadd.s32 %s156, 1
      %s158 = scalar_select %p155, %s156, %s157
      %p161 = pneg %p155
      %p162 = scmp.eq.s32.totalorder %s24, 1
      %p163 = por %p161, %p162
      %p164 = scmp.ne.s32.totalorder %s156, %s159
      %p165 = scmp.eq.s32.totalorder %s24, 0
      %p166 = por %p164, %p165
      %p167 = scmp.ne.s32.totalorder %s156, %s159
      %p168 = scmp.eq.s32.totalorder %s29, 1
      %p169 = por %p167, %p168
      %p170 = scmp.ne.s32.totalorder %s159, %s160
      %p171 = scmp.eq.s32.totalorder %s29, 0
      %p172 = por %p170, %p171
      %p173 = scmp.ne.s32.totalorder %s159, %s160
      %p174 = scmp.eq.s32.totalorder %s30, 1
      %p175 = por %p173, %p174
      %p177 = scmp.ne.s32.totalorder %s160, %s176
      %p178 = scmp.eq.s32.totalorder %s30, 0
      %p179 = por %p177, %p178
      %s180 = ssub.s32 %s31, %s43
      %s181 = ssub.s32 %s32, %s39
      %s182 = sor.u32 %s180, %s181
      %p183 = scmp.eq.s32.totalorder %s182, 0
      %s185 = sadd.s32 %s184, 1
      %s186 = scalar_select %p183, %s184, %s185
      %p189 = pneg %p183
      %p190 = scmp.eq.s32.totalorder %s24, 1
      %p191 = por %p189, %p190
      %p192 = scmp.ne.s32.totalorder %s184, %s187
      %p193 = scmp.eq.s32.totalorder %s24, 0
      %p194 = por %p192, %p193
      %p195 = scmp.ne.s32.totalorder %s184, %s187
      %p196 = scmp.eq.s32.totalorder %s29, 1
      %p197 = por %p195, %p196
      %p198 = scmp.ne.s32.totalorder %s187, %s188
      %p199 = scmp.eq.s32.totalorder %s29, 0
      %p200 = por %p198, %p199
      %p201 = scmp.ne.s32.totalorder %s187, %s188
      %p202 = scmp.eq.s32.totalorder %s30, 1
      %p203 = por %p201, %p202
      %p205 = scmp.ne.s32.totalorder %s188, %s204
      %p206 = scmp.eq.s32.totalorder %s30, 0
      %p207 = por %p205, %p206
      %p208 = scmp.le.s32.totalorder 1, %s24
      %p209 = scmp.lt.s32.totalorder %s24, 3
      %p210 = pnand %p208, %p209
      %p211 = pneg %p210
      // Predicated region
      $region9: #{tpu_custom_call.1} parent=5 // pred_check
        _
      $region10: #{tpu_custom_call.1} parent=5 // pred_check_branch
        %213 = sbr.rel (%p210) target = $region12
      $region11: #{tpu_custom_call.1} parent=5 // pred_region
        %s214 = ssub.s32 %s24, 1
      $region12: #{tpu_custom_call.1} parent=5 // pred_fallthru
        _
      %p215 = scmp.lt.s32.totalorder %s24, 2
      // Predicated region
      $region13: #{tpu_custom_call.1} parent=5 // pred_check
        %p216 = pneg %p215
      $region14: #{tpu_custom_call.1} parent=5 // pred_check_branch
        %218 = sbr.rel (%p216) target = $region16
      $region15: #{tpu_custom_call.1} parent=5 // pred_region
        // Predicated region
        $region17: #{tpu_custom_call.1} parent=15 // pred_check
          %p219 = pneg %p58
        $region18: #{tpu_custom_call.1} parent=15 // pred_check_branch
          %221 = sbr.rel (%p219) target = $region20
        $region19: #{tpu_custom_call.1} parent=15 // pred_region
          %s222 = sand.u32 %s48, 1
          %s223 = scalar_lea.sflag [#allocation3], %s222
          %s224 = sand.u32 %s48, 1
          %s225 = smul.addr %s224, 16
          %s226 = scalar_lea.vmem [#allocation2], %s225
          %s227 = smul.u32 2, %s31
          %s229 = ssub.s32 256, 256
          %230 = vsyncadd %s223, %s229
          %s231 = sadd.s32 %s32, %s227
          %s232 = smul.addr %s231, 128
          %s233 = scalar_lea.hbm %s0, %s232
          %s234 = sshll.u32 %s226, 4
          %s235 = int_to_ptr.vmem [resolvable:$true] %s234
          %240 = dma.hbm_to_vmem [thread:$0]  %s233, 256, %s235, %s223, 128, 128, 8
        $region20: #{tpu_custom_call.1} parent=15 // pred_fallthru
          _
        // Predicated region
        $region21: #{tpu_custom_call.1} parent=15 // pred_check
          %p241 = pneg %p84
        $region22: #{tpu_custom_call.1} parent=15 // pred_check_branch
          %243 = sbr.rel (%p241) target = $region24
        $region23: #{tpu_custom_call.1} parent=15 // pred_region
          %s244 = sand.u32 %s24, 1
          %s245 = scalar_lea.sflag [#allocation6], %s244
          %s246 = sand.u32 %s74, 1
          %s247 = smul.addr %s246, 16
          %s248 = scalar_lea.vmem [#allocation5], %s247
          %s249 = smul.u32 2, %s31
          %s251 = ssub.s32 256, 256
          %252 = vsyncadd %s245, %s251
          %s253 = smul.addr %s249, 128
          %s254 = scalar_lea.hbm %s1, %s253
          %s255 = sshll.u32 %s248, 4
          %s256 = int_to_ptr.vmem [resolvable:$true] %s255
          %261 = dma.hbm_to_vmem [thread:$0]  %s254, 256, %s256, %s245, 128, 128, 8
        $region24: #{tpu_custom_call.1} parent=15 // pred_fallthru
          _
        // Predicated region
        $region25: #{tpu_custom_call.1} parent=15 // pred_check
          %p262 = pneg %p110
        $region26: #{tpu_custom_call.1} parent=15 // pred_check_branch
          %264 = sbr.rel (%p262) target = $region28
        $region27: #{tpu_custom_call.1} parent=15 // pred_region
          %s265 = sand.u32 %s24, 1
          %s266 = scalar_lea.sflag [#allocation6], %s265
          %s267 = sand.u32 %s100, 1
          %s268 = smul.addr %s267, 16
          %s269 = scalar_lea.vmem [#allocation7], %s268
          %s270 = smul.u32 2, %s31
          %s272 = ssub.s32 256, 256
          %273 = vsyncadd %s266, %s272
          %s274 = smul.addr %s270, 128
          %s275 = scalar_lea.hbm %s2, %s274
          %s276 = sshll.u32 %s269, 4
          %s277 = int_to_ptr.vmem [resolvable:$true] %s276
          %282 = dma.hbm_to_vmem [thread:$0]  %s275, 256, %s277, %s266, 128, 128, 8
        $region28: #{tpu_custom_call.1} parent=15 // pred_fallthru
          _
        // Predicated region
        $region29: #{tpu_custom_call.1} parent=15 // pred_check
          %p283 = pneg %p138
        $region30: #{tpu_custom_call.1} parent=15 // pred_check_branch
          %285 = sbr.rel (%p283) target = $region32
        $region31: #{tpu_custom_call.1} parent=15 // pred_region
          %s286 = smul.u32 2, %s31
          %p287 = scmp.lt.s32.totalorder %s286, 3
          %s288 = scalar_select %p287, %s286, 3
          %p289 = scmp.lt.s32.totalorder %s32, 0
          %s290 = scalar_select %p289, %s32, 0
          %s291 = sadd.s32 %s290, %s288
          %s292 = smul.addr %s291, 2
          %s293 = scalar_lea.vmem %s3, %s292
          %s294 = smul.u32 2, %s31
        $region32: #{tpu_custom_call.1} parent=15 // pred_fallthru
          _
      $region16: #{tpu_custom_call.1} parent=5 // pred_fallthru
        _
      %p295 = scmp.le.s32.totalorder 1, %s24
      %p296 = scmp.lt.s32.totalorder %s24, 3
      %p297 = pnand %p295, %p296
      %p298 = pneg %p297
      // Predicated region
      $region33: #{tpu_custom_call.1} parent=5 // pred_check
        _
      $region34: #{tpu_custom_call.1} parent=5 // pred_check_branch
        %300 = sbr.rel (%p297) target = $region36
      $region35: #{tpu_custom_call.1} parent=5 // pred_region
        %s301 = ssub.s32 %s24, 1
        %s302 = sand.u32 %s51, 1
        %s303 = scalar_lea.sflag [#allocation3], %s302
        %s304 = sand.u32 %s51, 1
        %s305 = smul.addr %s304, 16
        %s306 = scalar_lea.vmem [#allocation2], %s305
        // Predicated region
        $region37: #{tpu_custom_call.1} parent=35 // pred_check
          %p307 = pneg %p64
        $region38: #{tpu_custom_call.1} parent=35 // pred_check_branch
          %309 = sbr.rel (%p307) target = $region40
        $region39: #{tpu_custom_call.1} parent=35 // pred_region
          %310 = dma.done %s303, 256
        $region40: #{tpu_custom_call.1} parent=35 // pred_fallthru
          _
        %s311 = sand.u32 %s29, 1
        %s312 = scalar_lea.sflag [#allocation6], %s311
        %s313 = sand.u32 %s77, 1
        %s314 = smul.addr %s313, 16
        %s315 = scalar_lea.vmem [#allocation5], %s314
        // Predicated region
        $region41: #{tpu_custom_call.1} parent=35 // pred_check
          %p316 = pneg %p90
        $region42: #{tpu_custom_call.1} parent=35 // pred_check_branch
          %318 = sbr.rel (%p316) target = $region44
        $region43: #{tpu_custom_call.1} parent=35 // pred_region
          %319 = dma.done %s312, 256
        $region44: #{tpu_custom_call.1} parent=35 // pred_fallthru
          _
        %s320 = sand.u32 %s29, 1
        %s321 = scalar_lea.sflag [#allocation6], %s320
        %s322 = sand.u32 %s103, 1
        %s323 = smul.addr %s322, 16
        %s324 = scalar_lea.vmem [#allocation7], %s323
        // Predicated region
        $region45: #{tpu_custom_call.1} parent=35 // pred_check
          %p325 = pneg %p116
        $region46: #{tpu_custom_call.1} parent=35 // pred_check_branch
          %327 = sbr.rel (%p325) target = $region48
        $region47: #{tpu_custom_call.1} parent=35 // pred_region
          %328 = dma.done %s321, 256
        $region48: #{tpu_custom_call.1} parent=35 // pred_fallthru
          _
        %s329 = sand.u32 %s51, 1
        %s330 = scalar_lea.sflag [#allocation3], %s329
        %s331 = sand.u32 %s51, 1
        %s332 = smul.addr %s331, 16
        %s333 = scalar_lea.vmem [#allocation2], %s332
        %p334 = pneg %p64
        %p335 = pneg %p61
        %s336 = sand.u32 %s29, 1
        %s337 = scalar_lea.sflag [#allocation6], %s336
        %s338 = sand.u32 %s77, 1
        %s339 = smul.addr %s338, 16
        %s340 = scalar_lea.vmem [#allocation5], %s339
        %p341 = pneg %p90
        %p342 = pneg %p87
        %s343 = sand.u32 %s29, 1
        %s344 = scalar_lea.sflag [#allocation6], %s343
        %s345 = sand.u32 %s103, 1
        %s346 = smul.addr %s345, 16
        %s347 = scalar_lea.vmem [#allocation7], %s346
        %p348 = pneg %p116
        %p349 = pneg %p113
        %s350 = smul.u32 2, %s33
        %p351 = scmp.lt.s32.totalorder %s350, 3
        %s352 = scalar_select %p351, %s350, 3
        %p353 = scmp.lt.s32.totalorder %s34, 0
        %s354 = scalar_select %p353, %s34, 0
        %s355 = sadd.s32 %s354, %s352
        %s356 = smul.addr %s355, 2
        %s357 = scalar_lea.vmem %s3, %s356
        %p358 = pneg %p144
        %p359 = pneg %p141
        %p360 = pneg %p172
        %p361 = pneg %p169
        %s362 = sand.u32 %s159, 1
        %s363 = scalar_lea.sflag [#allocation4], %s362
        %s364 = sand.u32 %s159, 1
        %s365 = smul.addr %s364, 16
        %s366 = scalar_lea.vmem [#allocation8], %s365
        %p367 = pneg %p200
        %p368 = pneg %p197
        %s369 = sand.u32 %s187, 1
        %s370 = scalar_lea.sflag [#allocation10], %s369
        %s371 = sand.u32 %s187, 1
        %s372 = smul.addr %s371, 16
        %s373 = scalar_lea.vmem [#allocation9], %s372
        %s374 = smul.u32 2, %s33
        %s375 = smul.u32 2, %s33
        %s376 = smul.u32 2, %s33
        %s377 = smul.u32 2, %s33
        %p378 = scmp.lt.s32.totalorder %s377, 3
        %s379 = scalar_select %p378, %s377, 3
        %p380 = scmp.lt.s32.totalorder %s34, 0
        %s381 = scalar_select %p380, %s34, 0
        %s382 = sadd.s32 %s381, %s379
        %s383 = smul.addr %s382, 2
        %s384 = scalar_lea.vmem %s3, %s383
        %s385 = smul.u32 2, %s33
        %s386 = smul.u32 2, %s33
        %s387 = smul.u32 2, %s33
        %v390 = vld [vmem:[%s306] sm:$0xff]
        %v391 = vld [vmem:[%s306 + $0x8] sm:$0xff]
        %v392 = vmul.f32 %v390, 0.17677669
        %v393 = vmul.f32 %v391, 0.17677669
        %v394 = vld [vmem:[%s315] sm:$0xff]
        %v395 = vld [vmem:[%s315 + $0x8] sm:$0xff]
        %v396 = vld [vmem:[%s324] sm:$0xff]
        %v397 = vld [vmem:[%s324 + $0x8] sm:$0xff]
        %vm398 = vcmask 261120
        %v400 = vsel %vm398, %v392, 0
        %v403 = vsel %vm398, %v394, 0
        %405 = vmatprep.subr.mxu0 0.0
        %406 = vmatpush1.xpose.msra.mxu0 %v403
        %407 = vmatprep.subr.mxu0 0.0
        %408 = vmatpush1.xpose.msra.mxu0 0.0
        %409 = vmatprep.subr.mxu0 0.0
        %410 = vmatpush1.xpose.msra.mxu0 0.0
        %411 = vmatprep.subr.mxu0 0.0
        %412 = vmatpush1.xpose.msra.mxu0 0.0
        %413 = vmatprep.subr.mxu0 0.0
        %414 = vmatpush1.xpose.msra.mxu0 0.0
        %415 = vmatprep.subr.mxu0 0.0
        %416 = vmatpush1.xpose.msra.mxu0 0.0
        %417 = vmatprep.subr.mxu0 0.0
        %418 = vmatpush1.xpose.msra.mxu0 0.0
        %419 = vmatprep.subr.mxu0 0.0
        %420 = vmatpush1.xpose.msra.mxu0 0.0
        %421 = vmatprep.subr.mxu0 0.0
        %422 = vmatpush1.xpose.msra.mxu0 0.0
        %423 = vmatprep.subr.mxu0 0.0
        %424 = vmatpush1.xpose.msra.mxu0 0.0
        %425 = vmatprep.subr.mxu0 0.0
        %426 = vmatpush1.xpose.msra.mxu0 0.0
        %427 = vmatprep.subr.mxu0 0.0
        %428 = vmatpush1.xpose.msra.mxu0 0.0
        %429 = vmatprep.subr.mxu0 0.0
        %430 = vmatpush1.xpose.msra.mxu0 0.0
        %431 = vmatprep.subr.mxu0 0.0
        %432 = vmatpush1.xpose.msra.mxu0 0.0
        %433 = vmatprep.subr.mxu0 0.0
        %434 = vmatpush1.xpose.msra.mxu0 0.0
        %435 = vmatprep.subr.mxu0 0.0
        %436 = vmatpush1.xpose.msra.mxu0 0.0
        %437 = vmatprep.subr.mxu0 0.0
        %438 = vmatpush1.xpose.msra.mxu0 0.0
        %439 = vmatprep.subr.mxu0 0.0
        %440 = vmatpush1.xpose.msra.mxu0 0.0
        %441 = vmatprep.subr.mxu0 0.0
        %442 = vmatpush1.xpose.msra.mxu0 0.0
        %443 = vmatprep.subr.mxu0 0.0
        %444 = vmatpush1.xpose.msra.mxu0 0.0
        %445 = vmatprep.subr.mxu0 0.0
        %446 = vmatpush1.xpose.msra.mxu0 0.0
        %447 = vmatprep.subr.mxu0 0.0
        %448 = vmatpush1.xpose.msra.mxu0 0.0
        %449 = vmatprep.subr.mxu0 0.0
        %450 = vmatpush1.xpose.msra.mxu0 0.0
        %451 = vmatprep.subr.mxu0 0.0
        %452 = vmatpush1.xpose.msra.mxu0 0.0
        %453 = vmatprep.subr.mxu0 0.0
        %454 = vmatpush1.xpose.msra.mxu0 0.0
        %455 = vmatprep.subr.mxu0 0.0
        %456 = vmatpush1.xpose.msra.mxu0 0.0
        %457 = vmatprep.subr.mxu0 0.0
        %458 = vmatpush1.xpose.msra.mxu0 0.0
        %459 = vmatprep.subr.mxu0 0.0
        %460 = vmatpush1.xpose.msra.mxu0 0.0
        %461 = vmatprep.subr.mxu0 0.0
        %462 = vmatpush1.xpose.msra.mxu0 0.0
        %463 = vmatprep.subr.mxu0 0.0
        %464 = vmatpush1.xpose.msra.mxu0 0.0
        %465 = vmatprep.subr.mxu0 0.0
        %466 = vmatpush1.xpose.msra.mxu0 0.0
        %467 = vmatprep.subr.mxu0 0.0
        %468 = vmatpush1.xpose.msra.mxu0 0.0
        %469 = vmatprep.mubr.f32.mxu0 0.0
        %470 = vmatmul.mubr.f32.gmra.mrb[0].mxu0 %v400
        %v471 = vpop.f32.mrb[0].mxu0
        %v472 = vadd.f32 0.0, %v471
        %v473 = vpop.f32.mrb[0].mxu0
        %474 = vdwg.mxu0
        %v476 = vsel %vm398, %v393, 0
        %v479 = vsel %vm398, %v395, 0
        %481 = vmatprep.subr.mxu0 0.0
        %482 = vmatpush1.xpose.msra.mxu0 %v479
        %483 = vmatprep.subr.mxu0 0.0
        %484 = vmatpush1.xpose.msra.mxu0 0.0
        %485 = vmatprep.subr.mxu0 0.0
        %486 = vmatpush1.xpose.msra.mxu0 0.0
        %487 = vmatprep.subr.mxu0 0.0
        %488 = vmatpush1.xpose.msra.mxu0 0.0
        %489 = vmatprep.subr.mxu0 0.0
        %490 = vmatpush1.xpose.msra.mxu0 0.0
        %491 = vmatprep.subr.mxu0 0.0
        %492 = vmatpush1.xpose.msra.mxu0 0.0
        %493 = vmatprep.subr.mxu0 0.0
        %494 = vmatpush1.xpose.msra.mxu0 0.0
        %495 = vmatprep.subr.mxu0 0.0
        %496 = vmatpush1.xpose.msra.mxu0 0.0
        %497 = vmatprep.subr.mxu0 0.0
        %498 = vmatpush1.xpose.msra.mxu0 0.0
        %499 = vmatprep.subr.mxu0 0.0
        %500 = vmatpush1.xpose.msra.mxu0 0.0
        %501 = vmatprep.subr.mxu0 0.0
        %502 = vmatpush1.xpose.msra.mxu0 0.0
        %503 = vmatprep.subr.mxu0 0.0
        %504 = vmatpush1.xpose.msra.mxu0 0.0
        %505 = vmatprep.subr.mxu0 0.0
        %506 = vmatpush1.xpose.msra.mxu0 0.0
        %507 = vmatprep.subr.mxu0 0.0
        %508 = vmatpush1.xpose.msra.mxu0 0.0
        %509 = vmatprep.subr.mxu0 0.0
        %510 = vmatpush1.xpose.msra.mxu0 0.0
        %511 = vmatprep.subr.mxu0 0.0
        %512 = vmatpush1.xpose.msra.mxu0 0.0
        %513 = vmatprep.subr.mxu0 0.0
        %514 = vmatpush1.xpose.msra.mxu0 0.0
        %515 = vmatprep.subr.mxu0 0.0
        %516 = vmatpush1.xpose.msra.mxu0 0.0
        %517 = vmatprep.subr.mxu0 0.0
        %518 = vmatpush1.xpose.msra.mxu0 0.0
        %519 = vmatprep.subr.mxu0 0.0
        %520 = vmatpush1.xpose.msra.mxu0 0.0
        %521 = vmatprep.subr.mxu0 0.0
        %522 = vmatpush1.xpose.msra.mxu0 0.0
        %523 = vmatprep.subr.mxu0 0.0
        %524 = vmatpush1.xpose.msra.mxu0 0.0
        %525 = vmatprep.subr.mxu0 0.0
        %526 = vmatpush1.xpose.msra.mxu0 0.0
        %527 = vmatprep.subr.mxu0 0.0
        %528 = vmatpush1.xpose.msra.mxu0 0.0
        %529 = vmatprep.subr.mxu0 0.0
        %530 = vmatpush1.xpose.msra.mxu0 0.0
        %531 = vmatprep.subr.mxu0 0.0
        %532 = vmatpush1.xpose.msra.mxu0 0.0
        %533 = vmatprep.subr.mxu0 0.0
        %534 = vmatpush1.xpose.msra.mxu0 0.0
        %535 = vmatprep.subr.mxu0 0.0
        %536 = vmatpush1.xpose.msra.mxu0 0.0
        %537 = vmatprep.subr.mxu0 0.0
        %538 = vmatpush1.xpose.msra.mxu0 0.0
        %539 = vmatprep.subr.mxu0 0.0
        %540 = vmatpush1.xpose.msra.mxu0 0.0
        %541 = vmatprep.subr.mxu0 0.0
        %542 = vmatpush1.xpose.msra.mxu0 0.0
        %543 = vmatprep.subr.mxu0 0.0
        %544 = vmatpush1.xpose.msra.mxu0 0.0
        %545 = vmatprep.mubr.f32.mxu0 0.0
        %546 = vmatmul.mubr.f32.gmra.mrb[0].mxu0 %v476
        %v547 = vpop.f32.mrb[0].mxu0
        %v548 = vadd.f32 0.0, %v547
        %v549 = vpop.f32.mrb[0].mxu0
        %550 = vdwg.mxu0
        %v551 = vld [vmem:[%s384] sm:$0x3]
        %v552 = vld [vmem:[%s384 + $0x2] sm:$0x3]
        %vm553 = vnez %v551
        %vm554 = vnez %v552
        %v555 = vsel %vm553, 16843009, 0
        %v556 = vsel %vm554, 16843009, 0
        %v557 = vunpack.c.0.s8 %v555
        %v558 = vunpack.c.0.s8 %v556
        %vm559 = vcmp.ne.s32.totalorder %v557, 0
        %vm560 = vcmp.ne.s32.totalorder %v558, 0
        %v561 = vsel %vm559, -1e+09, %v472
        %v562 = vsel %vm560, -1e+09, %v548
        %vm563 = vcmask 64512
        %v564 = vsel %vm563, %v561, -inf
        %565 = vmax.xlane.f32.xlu0 %v564
        %v566 = vpop.xlane.xlu0 %565
        %v567 = vsel %vm563, %v562, -inf
        %568 = vmax.xlane.f32.xlu0 %v567
        %v569 = vpop.xlane.xlu0 %568
        %v570 = vsub.f32 %v561, %v566
        %v571 = vsub.f32 %v562, %v569
        %v572 = vmul.f32 %v570, 1.442695
        %v573 = vpow.pop %v572
        %v574 = vmul.f32 %v571, 1.442695
        %v575 = vpow.pop %v574
        %v576 = vsel %vm563, %v573, 0.0
        %577 = vadd.xlane.f32.xlu0 %v576
        %v578 = vpop.xlane.xlu0 %577
        %v579 = vsel %vm563, %v575, 0.0
        %580 = vadd.xlane.f32.xlu0 %v579
        %v581 = vpop.xlane.xlu0 %580
        %v582 = vrcp.pop %v578
        %v583 = vmul.f32 %v573, %v582
        %v584 = vrcp.pop %v581
        %v585 = vmul.f32 %v575, %v584
        %v587 = vsel %vm563, %v583, 0
        %589 = vmatprep.subr.mxu0 0.0
        %590 = vmatpush1.msra.mxu0 %v396
        %591 = vmatprep.subr.mxu0 0.0
        %592 = vmatpush1.msra.mxu0 0.0
        %593 = vmatprep.subr.mxu0 0.0
        %594 = vmatpush1.msra.mxu0 0.0
        %595 = vmatprep.subr.mxu0 0.0
        %596 = vmatpush1.msra.mxu0 0.0
        %597 = vmatprep.subr.mxu0 0.0
        %598 = vmatpush1.msra.mxu0 0.0
        %599 = vmatprep.subr.mxu0 0.0
        %600 = vmatpush1.msra.mxu0 0.0
        %601 = vmatprep.subr.mxu0 0.0
        %602 = vmatpush1.msra.mxu0 0.0
        %603 = vmatprep.subr.mxu0 0.0
        %604 = vmatpush1.msra.mxu0 0.0
        %605 = vmatprep.subr.mxu0 0.0
        %606 = vmatpush1.msra.mxu0 0.0
        %607 = vmatprep.subr.mxu0 0.0
        %608 = vmatpush1.msra.mxu0 0.0
        %609 = vmatprep.subr.mxu0 0.0
        %610 = vmatpush1.msra.mxu0 0.0
        %611 = vmatprep.subr.mxu0 0.0
        %612 = vmatpush1.msra.mxu0 0.0
        %613 = vmatprep.subr.mxu0 0.0
        %614 = vmatpush1.msra.mxu0 0.0
        %615 = vmatprep.subr.mxu0 0.0
        %616 = vmatpush1.msra.mxu0 0.0
        %617 = vmatprep.subr.mxu0 0.0
        %618 = vmatpush1.msra.mxu0 0.0
        %619 = vmatprep.subr.mxu0 0.0
        %620 = vmatpush1.msra.mxu0 0.0
        %621 = vmatprep.subr.mxu0 0.0
        %622 = vmatpush1.msra.mxu0 0.0
        %623 = vmatprep.subr.mxu0 0.0
        %624 = vmatpush1.msra.mxu0 0.0
        %625 = vmatprep.subr.mxu0 0.0
        %626 = vmatpush1.msra.mxu0 0.0
        %627 = vmatprep.subr.mxu0 0.0
        %628 = vmatpush1.msra.mxu0 0.0
        %629 = vmatprep.subr.mxu0 0.0
        %630 = vmatpush1.msra.mxu0 0.0
        %631 = vmatprep.subr.mxu0 0.0
        %632 = vmatpush1.msra.mxu0 0.0
        %633 = vmatprep.subr.mxu0 0.0
        %634 = vmatpush1.msra.mxu0 0.0
        %635 = vmatprep.subr.mxu0 0.0
        %636 = vmatpush1.msra.mxu0 0.0
        %637 = vmatprep.subr.mxu0 0.0
        %638 = vmatpush1.msra.mxu0 0.0
        %639 = vmatprep.subr.mxu0 0.0
        %640 = vmatpush1.msra.mxu0 0.0
        %641 = vmatprep.subr.mxu0 0.0
        %642 = vmatpush1.msra.mxu0 0.0
        %643 = vmatprep.subr.mxu0 0.0
        %644 = vmatpush1.msra.mxu0 0.0
        %645 = vmatprep.subr.mxu0 0.0
        %646 = vmatpush1.msra.mxu0 0.0
        %647 = vmatprep.subr.mxu0 0.0
        %648 = vmatpush1.msra.mxu0 0.0
        %649 = vmatprep.subr.mxu0 0.0
        %650 = vmatpush1.msra.mxu0 0.0
        %651 = vmatprep.subr.mxu0 0.0
        %652 = vmatpush1.msra.mxu0 0.0
        %653 = vmatprep.mubr.f32.mxu0 0.0
        %654 = vmatmul.mubr.f32.gmra.mrb[0].mxu0 %v587
        %v655 = vpop.f32.mrb[0].mxu0
        %v656 = vadd.f32 0.0, %v655
        %v657 = vpop.f32.mrb[0].mxu0
        %658 = vdwg.mxu0
        %v660 = vsel %vm563, %v585, 0
        %662 = vmatprep.subr.mxu0 0.0
        %663 = vmatpush1.msra.mxu0 %v397
        %664 = vmatprep.subr.mxu0 0.0
        %665 = vmatpush1.msra.mxu0 0.0
        %666 = vmatprep.subr.mxu0 0.0
        %667 = vmatpush1.msra.mxu0 0.0
        %668 = vmatprep.subr.mxu0 0.0
        %669 = vmatpush1.msra.mxu0 0.0
        %670 = vmatprep.subr.mxu0 0.0
        %671 = vmatpush1.msra.mxu0 0.0
        %672 = vmatprep.subr.mxu0 0.0
        %673 = vmatpush1.msra.mxu0 0.0
        %674 = vmatprep.subr.mxu0 0.0
        %675 = vmatpush1.msra.mxu0 0.0
        %676 = vmatprep.subr.mxu0 0.0
        %677 = vmatpush1.msra.mxu0 0.0
        %678 = vmatprep.subr.mxu0 0.0
        %679 = vmatpush1.msra.mxu0 0.0
        %680 = vmatprep.subr.mxu0 0.0
        %681 = vmatpush1.msra.mxu0 0.0
        %682 = vmatprep.subr.mxu0 0.0
        %683 = vmatpush1.msra.mxu0 0.0
        %684 = vmatprep.subr.mxu0 0.0
        %685 = vmatpush1.msra.mxu0 0.0
        %686 = vmatprep.subr.mxu0 0.0
        %687 = vmatpush1.msra.mxu0 0.0
        %688 = vmatprep.subr.mxu0 0.0
        %689 = vmatpush1.msra.mxu0 0.0
        %690 = vmatprep.subr.mxu0 0.0
        %691 = vmatpush1.msra.mxu0 0.0
        %692 = vmatprep.subr.mxu0 0.0
        %693 = vmatpush1.msra.mxu0 0.0
        %694 = vmatprep.subr.mxu0 0.0
        %695 = vmatpush1.msra.mxu0 0.0
        %696 = vmatprep.subr.mxu0 0.0
        %697 = vmatpush1.msra.mxu0 0.0
        %698 = vmatprep.subr.mxu0 0.0
        %699 = vmatpush1.msra.mxu0 0.0
        %700 = vmatprep.subr.mxu0 0.0
        %701 = vmatpush1.msra.mxu0 0.0
        %702 = vmatprep.subr.mxu0 0.0
        %703 = vmatpush1.msra.mxu0 0.0
        %704 = vmatprep.subr.mxu0 0.0
        %705 = vmatpush1.msra.mxu0 0.0
        %706 = vmatprep.subr.mxu0 0.0
        %707 = vmatpush1.msra.mxu0 0.0
        %708 = vmatprep.subr.mxu0 0.0
        %709 = vmatpush1.msra.mxu0 0.0
        %710 = vmatprep.subr.mxu0 0.0
        %711 = vmatpush1.msra.mxu0 0.0
        %712 = vmatprep.subr.mxu0 0.0
        %713 = vmatpush1.msra.mxu0 0.0
        %714 = vmatprep.subr.mxu0 0.0
        %715 = vmatpush1.msra.mxu0 0.0
        %716 = vmatprep.subr.mxu0 0.0
        %717 = vmatpush1.msra.mxu0 0.0
        %718 = vmatprep.subr.mxu0 0.0
        %719 = vmatpush1.msra.mxu0 0.0
        %720 = vmatprep.subr.mxu0 0.0
        %721 = vmatpush1.msra.mxu0 0.0
        %722 = vmatprep.subr.mxu0 0.0
        %723 = vmatpush1.msra.mxu0 0.0
        %724 = vmatprep.subr.mxu0 0.0
        %725 = vmatpush1.msra.mxu0 0.0
        %726 = vmatprep.mubr.f32.mxu0 0.0
        %727 = vmatmul.mubr.f32.gmra.mrb[0].mxu0 %v660
        %v728 = vpop.f32.mrb[0].mxu0
        %v729 = vadd.f32 0.0, %v728
        %v730 = vpop.f32.mrb[0].mxu0
        %731 = vdwg.mxu0
        %732 = vst.msk [vmem:[%s366] sm:$0xff] %vm398, %v656
        %733 = vst.msk [vmem:[%s366 + $0x8] sm:$0xff] %vm398, %v729
        %734 = vst.msk [vmem:[%s373] sm:$0xff] %vm563, %v583
        %735 = vst.msk [vmem:[%s373 + $0x8] sm:$0xff] %vm563, %v585
        %s736 = sand.u32 %s159, 1
        %s737 = scalar_lea.sflag [#allocation4], %s736
        %s738 = sand.u32 %s159, 1
        %s739 = smul.addr %s738, 16
        %s740 = scalar_lea.vmem [#allocation8], %s739
        %s741 = sand.u32 %s187, 1
        %s742 = scalar_lea.sflag [#allocation10], %s741
        %s743 = sand.u32 %s187, 1
        %s744 = smul.addr %s743, 16
        %s745 = scalar_lea.vmem [#allocation9], %s744
        // Predicated region
        $region49: #{tpu_custom_call.1} parent=35 // pred_check
          %p746 = pneg %p169
        $region50: #{tpu_custom_call.1} parent=35 // pred_check_branch
          %748 = sbr.rel (%p746) target = $region52
        $region51: #{tpu_custom_call.1} parent=35 // pred_region
          %s749 = smul.u32 2, %s33
          %s751 = ssub.s32 256, 256
          %752 = vsyncadd %s737, %s751
          %s753 = sadd.s32 %s34, %s749
          %s754 = smul.addr %s753, 128
          %s755 = scalar_lea.hbm %s4, %s754
          %s756 = sshll.u32 %s740, 4
          %s757 = int_to_ptr.vmem [resolvable:$true] %s756
          %762 = dma.vmem_to_hbm [thread:$0]  %s757, 256, %s755, %s737, 128, 128, 8
        $region52: #{tpu_custom_call.1} parent=35 // pred_fallthru
          _
        // Predicated region
        $region53: #{tpu_custom_call.1} parent=35 // pred_check
          %p763 = pneg %p197
        $region54: #{tpu_custom_call.1} parent=35 // pred_check_branch
          %765 = sbr.rel (%p763) target = $region56
        $region55: #{tpu_custom_call.1} parent=35 // pred_region
          %s766 = smul.u32 2, %s33
          %s768 = ssub.s32 256, 256
          %769 = vsyncadd %s742, %s768
          %s770 = sadd.s32 %s34, %s766
          %s771 = smul.addr %s770, 128
          %s772 = scalar_lea.hbm %s5, %s771
          %s773 = sshll.u32 %s745, 4
          %s774 = int_to_ptr.vmem [resolvable:$true] %s773
          %779 = dma.vmem_to_hbm [thread:$0]  %s774, 256, %s772, %s742, 128, 128, 8
        $region56: #{tpu_custom_call.1} parent=35 // pred_fallthru
          _
      $region36: #{tpu_custom_call.1} parent=5 // pred_fallthru
        _
      %p780 = scmp.le.s32.totalorder 2, %s24
      // Predicated region
      $region57: #{tpu_custom_call.1} parent=5 // pred_check
        %p781 = pneg %p780
      $region58: #{tpu_custom_call.1} parent=5 // pred_check_branch
        %783 = sbr.rel (%p781) target = $region60
      $region59: #{tpu_custom_call.1} parent=5 // pred_region
        %s784 = ssub.s32 %s24, 2
        // Predicated region
        $region61: #{tpu_custom_call.1} parent=59 // pred_check
          %p785 = pneg %p175
        $region62: #{tpu_custom_call.1} parent=59 // pred_check_branch
          %787 = sbr.rel (%p785) target = $region64
        $region63: #{tpu_custom_call.1} parent=59 // pred_region
          %s788 = sand.u32 %s160, 1
          %s789 = scalar_lea.sflag [#allocation4], %s788
          %s790 = sand.u32 %s160, 1
          %s791 = smul.addr %s790, 16
          %s792 = scalar_lea.vmem [#allocation8], %s791
          %793 = dma.done %s789, 256
        $region64: #{tpu_custom_call.1} parent=59 // pred_fallthru
          _
        // Predicated region
        $region65: #{tpu_custom_call.1} parent=59 // pred_check
          %p794 = pneg %p203
        $region66: #{tpu_custom_call.1} parent=59 // pred_check_branch
          %796 = sbr.rel (%p794) target = $region68
        $region67: #{tpu_custom_call.1} parent=59 // pred_region
          %s797 = sand.u32 %s188, 1
          %s798 = scalar_lea.sflag [#allocation10], %s797
          %s799 = sand.u32 %s188, 1
          %s800 = smul.addr %s799, 16
          %s801 = scalar_lea.vmem [#allocation9], %s800
          %802 = dma.done %s798, 256
        $region68: #{tpu_custom_call.1} parent=59 // pred_fallthru
          _
      $region60: #{tpu_custom_call.1} parent=5 // pred_fallthru
        _
    $region6: #{tpu_custom_call.1} parent=1 // loop_footer
      %s28 = sadd.s32 1, %s24
    $region7: #{tpu_custom_call.1} parent=1 // loop_footer_branch
      %23 = sbr.rel target = $region3
    $region8: #{tpu_custom_call.1} parent=1 // loop_exit
      _
    %803 = vsyncpa [#allocation3], 1
    %s804 = scalar_lea.sflag [#allocation3], 1
    %805 = vsyncpa %s804, 1
    %806 = vsyncpa [#allocation6], 1
    %s807 = scalar_lea.sflag [#allocation6], 1
    %808 = vsyncpa %s807, 1
    %809 = vsyncpa [#allocation4], 1
    %s810 = scalar_lea.sflag [#allocation4], 1
    %811 = vsyncpa %s810, 1
    %812 = vsyncpa [#allocation10], 1
    %s813 = scalar_lea.sflag [#allocation10], 1
    %814 = vsyncpa %s813, 1

</llo_original>
